<compile_context>
chip_gen: v5e
topology: v5e:2x2
jax: 0.10.0
libtpu: 0.0.40
codegen_flags: <defaults>
</compile_context>

<pallas_src>
import functools

import jax
import jax.numpy as jnp
from jax.experimental import pallas as pl
from jax.experimental.pallas import tpu as pltpu

LANES = 128
MAX_BLOCK_ROWS = 2048      # 2048*128*4B = 1 MiB per f32 tile, 2 MiB double-buffered
NUM_PARTIALS = 2           # leading "parallel" axis -> both TensorCores on v7x


def _one_sided_kernel(x_ref, o_ref, *, block_rows: int, n_rows: int):
    c = pl.program_id(0)                 # partial-sum slice (parallel axis)
    j = pl.program_id(1)                 # row-block sweep (reduction axis)
    nbj = pl.num_programs(1)

    # The (8, 128) output block is resident across the j sweep: it is the
    # accumulator for slice c.
    @pl.when(j == 0)
    def _():
        o_ref[...] = jnp.zeros_like(o_ref)

    x = x_ref[...].astype(jnp.float32)   # per-tile upcast; input stays native dtype in HBM
    v = jnp.maximum(-x, 0.0)             # relu(-x)

    # Mask rows past the true row count.  Covers (a) the ragged last block,
    # which Pallas pads with unspecified values, and (b) the duplicated block
    # slice 1 re-reads (via the clamped index_map) when the block count is odd.
    bid = c * nbj + j                    # un-clamped global block id
    row_ids = bid * block_rows + jax.lax.broadcasted_iota(jnp.int32, v.shape, 0)
    v = jnp.where(row_ids < n_rows, v, 0.0)

    # (block_rows, 128) -> (8, 128) partial sums: pure VPU vreg adds, no XLU.
    o_ref[...] += v.reshape(-1, 8, LANES).sum(axis=0)


def one_sided(x: jax.Array) -> jax.Array:
    """Returns the scalar -mean(relu(-x)), matching ONE_SIDED.forward (f32)."""
    n = x.size
    flat = x.reshape(-1)                 # free reshape, keeps native dtype

    # Row tiles need a sublane-aligned height; pad (with zeros, exact since
    # relu(-0)==0) only if the flat size is not already a multiple of
    # (sublanes * 128) elements -- rare for NCHW feature maps, so the common
    # path does zero extra HBM passes.
    packing = max(1, 4 // jnp.dtype(x.dtype).itemsize)
    chunk = 8 * packing * LANES
    if n % chunk != 0:
        flat = jnp.pad(flat, (0, chunk - n % chunk))

    rows = flat.size // LANES
    mat = flat.reshape(rows, LANES)

    block_rows = min(MAX_BLOCK_ROWS, rows)     # multiple of 8 (or the full dim)
    nb = pl.cdiv(rows, block_rows)             # total row blocks
    nbj = pl.cdiv(nb, NUM_PARTIALS)            # row blocks per slice

    if NUM_PARTIALS * nbj > nb:
        # Keep every DMA in bounds; the duplicated block is masked in-kernel.
        def in_map(c, j):
            return (jnp.minimum(c * nbj + j, nb - 1), 0)
    else:
        def in_map(c, j):
            return (c * nbj + j, 0)

    kernel = functools.partial(_one_sided_kernel, block_rows=block_rows, n_rows=rows)

    partials = pl.pallas_call(
        kernel,
        out_shape=jax.ShapeDtypeStruct((NUM_PARTIALS * 8, LANES), jnp.float32),
        grid_spec=pltpu.PrefetchScalarGridSpec(
            num_scalar_prefetch=0,
            grid=(NUM_PARTIALS, nbj),
            in_specs=[pl.BlockSpec((block_rows, LANES), in_map)],
            out_specs=pl.BlockSpec((8, LANES), lambda c, j: (c, 0)),
        ),
        compiler_params=pltpu.CompilerParams(
            dimension_semantics=("parallel", "arbitrary"),
        ),
    )(mat)

    # Tiny final combine (2048 f32) in the wrapper.
    return -(jnp.sum(partials) * (1.0 / float(n)))


def one_sided_ref(x: jax.Array) -> jax.Array:
    return -jnp.mean(jax.nn.relu(-x.astype(jnp.float32)))


if __name__ == "__main__":
    key = jax.random.PRNGKey(0)
    fn = jax.jit(one_sided)

    # Spec-consistent small NCHW input (single-block path).
    x1 = jax.random.normal(key, (2, 4, 16, 16), dtype=jnp.float32)
    got1 = jax.block_until_ready(fn(x1))
    want1 = jax.block_until_ready(one_sided_ref(x1))
    assert jnp.allclose(got1, want1, atol=1e-6, rtol=1e-5), (got1, want1)

    # Larger input: exercises multi-block accumulation, the 2-slice parallel
    # axis, the ragged last block, and the clamped index_map.
    x2 = jax.random.normal(jax.random.PRNGKey(0), (4, 16, 96, 96), dtype=jnp.float32)
    got2 = jax.block_until_ready(jax.jit(one_sided)(x2))
    want2 = jax.block_until_ready(one_sided_ref(x2))
    assert jnp.allclose(got2, want2, atol=1e-6, rtol=1e-4), (got2, want2)

    print("KERNEL_OK")
</pallas_src>

<mosaic_0001>
module attributes {stable_mosaic.version = 11 : i64} {
  func.func @_one_sided_kernel(%arg0: i32, %arg1: i32, %arg2: memref<16x128xf32, #tpu.memory_space<vmem>>, %arg3: memref<8x128xf32, #tpu.memory_space<vmem>>) attributes {dimension_semantics = [#tpu.dimension_semantics<parallel>, #tpu.dimension_semantics<arbitrary>], iteration_bounds = array<i64: 2, 1>, scalar_prefetch = 0 : i64, scratch_operands = 0 : i64, tpu.core_type = #tpu.core_type<tc>, window_params = [{transform_indices = @transform_0, window_bounds = array<i64: 16, 128>}, {transform_indices = @transform_1, window_bounds = array<i64: 8, 128>}]} {
    %c0_i32 = arith.constant 0 : i32
    %0 = arith.cmpi eq, %arg1, %c0_i32 : i32
    %1 = arith.extui %0 : i1 to i32
    %c0_i32_0 = arith.constant 0 : i32
    %2 = arith.cmpi ne, %1, %c0_i32_0 : i32
    scf.if %2 {
      %cst_10 = arith.constant 0.000000e+00 : f32
      %23 = vector.broadcast %cst_10 : f32 to vector<8x128xf32>
      %c0_11 = arith.constant 0 : index
      %c0_12 = arith.constant 0 : index
      %24 = vector.load %arg3[%c0_11, %c0_12] : memref<8x128xf32, #tpu.memory_space<vmem>>, vector<8x128xf32>
      tpu.vector_store %arg3[%c0_11, %c0_12], %23 {strides = array<i32>} : memref<8x128xf32, #tpu.memory_space<vmem>>, vector<8x128xf32>,
    } else {
    }
    %c0 = arith.constant 0 : index
    %c0_1 = arith.constant 0 : index
    %3 = vector.load %arg2[%c0, %c0_1] : memref<16x128xf32, #tpu.memory_space<vmem>>, vector<16x128xf32>
    %cst = arith.constant 0.000000e+00 : f32
    %4 = vector.broadcast %cst : f32 to vector<16x128xf32>
    %5 = arith.subf %4, %3 : vector<16x128xf32>
    %cst_2 = arith.constant 0.000000e+00 : f32
    %6 = vector.broadcast %cst_2 : f32 to vector<16x128xf32>
    %7 = arith.maximumf %5, %6 : vector<16x128xf32>
    %c1_i32 = arith.constant 1 : i32
    %8 = arith.muli %arg0, %c1_i32 : i32
    %9 = arith.addi %8, %arg1 : i32
    %c16_i32 = arith.constant 16 : i32
    %10 = arith.muli %9, %c16_i32 : i32
    %11 = tpu.iota {dimensions = array<i32: 0>} : vector<16x128xi32>
    %12 = vector.broadcast %10 : i32 to vector<16x128xi32>
    %13 = arith.addi %12, %11 : vector<16x128xi32>
    %c16_i32_3 = arith.constant 16 : i32
    %14 = vector.broadcast %c16_i32_3 : i32 to vector<16x128xi32>
    %15 = arith.cmpi slt, %13, %14 : vector<16x128xi32>
    %cst_4 = arith.constant 0.000000e+00 : f32
    %16 = vector.broadcast %cst_4 : f32 to vector<16x128xf32>
    %17 = arith.select %15, %7, %16 : vector<16x128xi1>, vector<16x128xf32>
    %c0_5 = arith.constant 0 : index
    %c0_6 = arith.constant 0 : index
    %18 = vector.load %arg3[%c0_5, %c0_6] : memref<8x128xf32, #tpu.memory_space<vmem>>, vector<8x128xf32>
    %19 = vector.shape_cast %17 : vector<16x128xf32> to vector<2x8x128xf32>
    %cst_7 = arith.constant dense<0.000000e+00> : vector<8x128xf32>
    %20 = vector.multi_reduction <add>, %19, %cst_7 [0] : vector<2x8x128xf32> to vector<8x128xf32>
    %21 = arith.addf %18, %20 : vector<8x128xf32>
    %c0_8 = arith.constant 0 : index
    %c0_9 = arith.constant 0 : index
    %22 = vector.load %arg3[%c0_8, %c0_9] : memref<8x128xf32, #tpu.memory_space<vmem>>, vector<8x128xf32>
    tpu.vector_store %arg3[%c0_8, %c0_9], %21 {strides = array<i32>} : memref<8x128xf32, #tpu.memory_space<vmem>>, vector<8x128xf32>,
    return
  }
  func.func @transform_0(%arg0: i32, %arg1: i32) -> (i32, i32) {
    %c1_i32 = arith.constant 1 : i32
    %0 = arith.muli %arg0, %c1_i32 : i32
    %1 = arith.addi %0, %arg1 : i32
    %c0_i32 = arith.constant 0 : i32
    %2 = arith.minsi %1, %c0_i32 : i32
    %c0_i32_0 = arith.constant 0 : i32
    %c0_i32_1 = arith.constant 0 : i32
    return %2, %c0_i32_0 : i32, i32
  }
  func.func @transform_1(%arg0: i32, %arg1: i32) -> (i32, i32) {
    %c0_i32 = arith.constant 0 : i32
    %c0_i32_0 = arith.constant 0 : i32
    return %arg0, %c0_i32 : i32, i32
  }
}

</mosaic_0001>

<llo_original>
// kernel: one_sided.1
$region0: #{one_sided.1}
  #allocation0 [shape = 'u32[]', space=smem, size = 0x4, offset = 0x4, fixed_abs, tag = 'smem constant byte address 0x4 - core index']
  #allocation1 [shape = 'u32[72,128]{1,0:T(1,128)}', space=vmem, size = 0x9000, scoped, tag = 'internal scratch']
  %s0 = inlined_call_operand.vmem [shape: f32[16,128], index: 0, kind: input, shape index: {}]
  %s1 = inlined_call_operand.vmem [shape: f32[16,128], index: 1, kind: output, shape index: {}]
  %s2 = sld [smem:[#allocation0]]
  $region41: #{one_sided.1} parent=0
    _
  %s4 = ssub.s32 1, %s2
  %s5 = scalar_select 0, %s4, %s2
  loop: start=0, step=1, limit=4
  $region2: #{one_sided.1} parent=0 // loop_pre_header
    _
  $region3: #{one_sided.1} parent=0 // loop_header
    %s7 = sphi 0, %s11
    %p8 = scmp.ge.s32.totalorder %s7, 4
    %s14 = sphi 0, %s26
    %s15 = sphi 0, %s22
    %s16 = sphi 0, %s14
    %s17 = sphi 0, %s15
    %s18 = sphi 0, %s16
    %s19 = sphi 0, %s17
    %s35 = sphi 0, %s37
    %s38 = sphi 0, %s35
    %s39 = sphi 0, %s38
    %s55 = sphi 0, %s39
    %s61 = sphi 0, %s63
    %s64 = sphi 0, %s61
    %s65 = sphi 0, %s64
    %s81 = sphi 0, %s65
  $region4: #{one_sided.1} parent=0 // loop_header_branch
    %10 = sbr.rel (%p8) target = $region8
  $region5: #{one_sided.1} parent=0 // loop_body
    %s12 = ssub.s32 %s7, 1
    %s13 = ssub.s32 %s7, 2
    %s20 = sadd.s32 1, %s15
    %p21 = scmp.ge.s32.totalorder %s20, 1
    %s22 = scalar_select %p21, 0, %s20
    %s23 = sadd.s32 1, %s14
    %s24 = scalar_select %p21, %s23, %s14
    %p25 = scmp.ge.s32.totalorder %s24, 2
    %s26 = scalar_select %p25, 0, %s24
    %s27 = sadd.s32 %s14, %s15
    %p28 = scmp.lt.s32.totalorder %s27, 0
    %s29 = scalar_select %p28, %s27, 0
    %s30 = sadd.s32 %s26, %s22
    %p31 = scmp.lt.s32.totalorder %s30, 0
    %s32 = scalar_select %p31, %s30, 0
    %s33 = ssub.s32 %s29, %s32
    %p34 = scmp.eq.s32.totalorder %s33, 0
    %s36 = sadd.s32 %s35, 1
    %s37 = scalar_select %p34, %s35, %s36
    %p40 = pneg %p34
    %p41 = scmp.eq.s32.totalorder %s7, 1
    %p42 = por %p40, %p41
    %p43 = scmp.ne.s32.totalorder %s35, %s38
    %p44 = scmp.eq.s32.totalorder %s7, 0
    %p45 = por %p43, %p44
    %p46 = scmp.ne.s32.totalorder %s35, %s38
    %p47 = scmp.eq.s32.totalorder %s12, 1
    %p48 = por %p46, %p47
    %p49 = scmp.ne.s32.totalorder %s38, %s39
    %p50 = scmp.eq.s32.totalorder %s12, 0
    %p51 = por %p49, %p50
    %p52 = scmp.ne.s32.totalorder %s38, %s39
    %p53 = scmp.eq.s32.totalorder %s13, 1
    %p54 = por %p52, %p53
    %p56 = scmp.ne.s32.totalorder %s39, %s55
    %p57 = scmp.eq.s32.totalorder %s13, 0
    %p58 = por %p56, %p57
    %s59 = ssub.s32 %s14, %s26
    %p60 = scmp.eq.s32.totalorder %s59, 0
    %s62 = sadd.s32 %s61, 1
    %s63 = scalar_select %p60, %s61, %s62
    %p66 = pneg %p60
    %p67 = scmp.eq.s32.totalorder %s7, 1
    %p68 = por %p66, %p67
    %p69 = scmp.ne.s32.totalorder %s61, %s64
    %p70 = scmp.eq.s32.totalorder %s7, 0
    %p71 = por %p69, %p70
    %p72 = scmp.ne.s32.totalorder %s61, %s64
    %p73 = scmp.eq.s32.totalorder %s12, 1
    %p74 = por %p72, %p73
    %p75 = scmp.ne.s32.totalorder %s64, %s65
    %p76 = scmp.eq.s32.totalorder %s12, 0
    %p77 = por %p75, %p76
    %p78 = scmp.ne.s32.totalorder %s64, %s65
    %p79 = scmp.eq.s32.totalorder %s13, 1
    %p80 = por %p78, %p79
    %p82 = scmp.ne.s32.totalorder %s65, %s81
    %p83 = scmp.eq.s32.totalorder %s13, 0
    %p84 = por %p82, %p83
    %p85 = scmp.le.s32.totalorder 1, %s7
    %p86 = scmp.lt.s32.totalorder %s7, 3
    %p87 = pnand %p85, %p86
    %p88 = pneg %p87
    // Predicated region
    $region9: #{one_sided.1} parent=5 // pred_check
      _
    $region10: #{one_sided.1} parent=5 // pred_check_branch
      %90 = sbr.rel (%p87) target = $region12
    $region11: #{one_sided.1} parent=5 // pred_region
      %s91 = ssub.s32 %s7, 1
    $region12: #{one_sided.1} parent=5 // pred_fallthru
      _
    %p92 = scmp.lt.s32.totalorder %s7, 2
    // Predicated region
    $region13: #{one_sided.1} parent=5 // pred_check
      %p93 = pneg %p92
    $region14: #{one_sided.1} parent=5 // pred_check_branch
      %95 = sbr.rel (%p93) target = $region16
    $region15: #{one_sided.1} parent=5 // pred_region
      // Predicated region
      $region17: #{one_sided.1} parent=15 // pred_check
        %p96 = pneg %p45
      $region18: #{one_sided.1} parent=15 // pred_check_branch
        %98 = sbr.rel (%p96) target = $region20
      $region19: #{one_sided.1} parent=15 // pred_region
        %s99 = sadd.s32 %s14, %s15
        %p100 = scmp.lt.s32.totalorder %s99, 0
        %s101 = scalar_select %p100, %s99, 0
        %s102 = smul.u32 2, %s101
        %p103 = scmp.lt.s32.totalorder %s102, 1
        %s104 = scalar_select %p103, %s102, 1
        %s105 = smul.addr %s104, 8
        %s106 = scalar_lea.vmem %s0, %s105
        %s107 = sadd.s32 %s14, %s15
        %p108 = scmp.lt.s32.totalorder %s107, 0
        %s109 = scalar_select %p108, %s107, 0
        %s110 = smul.u32 2, %s109
      $region20: #{one_sided.1} parent=15 // pred_fallthru
        _
    $region16: #{one_sided.1} parent=5 // pred_fallthru
      _
    %p111 = scmp.le.s32.totalorder 1, %s7
    %p112 = scmp.lt.s32.totalorder %s7, 3
    %p113 = pnand %p111, %p112
    %p114 = pneg %p113
    // Predicated region
    $region21: #{one_sided.1} parent=5 // pred_check
      _
    $region22: #{one_sided.1} parent=5 // pred_check_branch
      %116 = sbr.rel (%p113) target = $region24
    $region23: #{one_sided.1} parent=5 // pred_region
      %s117 = ssub.s32 %s7, 1
      %s118 = sadd.s32 %s16, %s17
      %p119 = scmp.lt.s32.totalorder %s118, 0
      %s120 = scalar_select %p119, %s118, 0
      %s121 = smul.u32 2, %s120
      %p122 = scmp.lt.s32.totalorder %s121, 1
      %s123 = scalar_select %p122, %s121, 1
      %s124 = smul.addr %s123, 8
      %s125 = scalar_lea.vmem %s0, %s124
      %p126 = pneg %p51
      %p127 = pneg %p48
      %p128 = pneg %p77
      %p129 = pneg %p74
      %p130 = scmp.lt.s32.totalorder %s16, 1
      %s131 = scalar_select %p130, %s16, 1
      %s132 = smul.addr %s131, 8
      %s133 = scalar_lea.vmem %s1, %s132
      %s134 = sadd.s32 %s16, %s17
      %p135 = scmp.lt.s32.totalorder %s134, 0
      %s136 = scalar_select %p135, %s134, 0
      %s137 = smul.u32 2, %s136
      %p138 = scmp.lt.s32.totalorder %s137, 1
      %s139 = scalar_select %p138, %s137, 1
      %s140 = smul.addr %s139, 8
      %s141 = scalar_lea.vmem %s0, %s140
      %s142 = sadd.s32 %s16, %s17
      %p143 = scmp.lt.s32.totalorder %s142, 0
      %s144 = scalar_select %p143, %s142, 0
      %s145 = smul.u32 2, %s144
      %p146 = scmp.lt.s32.totalorder %s16, 1
      %s147 = scalar_select %p146, %s16, 1
      %s148 = smul.addr %s147, 8
      %s149 = scalar_lea.vmem %s1, %s148
      %p150 = scmp.eq.s32.totalorder %s17, 0
      // Predicated region
      $region25: #{one_sided.1} parent=23 // pred_check
        %p151 = pneg %p150
      $region26: #{one_sided.1} parent=23 // pred_check_branch
        %153 = sbr.rel (%p151) target = $region28
      $region27: #{one_sided.1} parent=23 // pred_region
        %154 = vst [vmem:[%s149] sm:$0xff] 0.0
      $region28: #{one_sided.1} parent=23 // pred_fallthru
        _
      %v155 = vld [vmem:[%s141] sm:$0xff]
      %v156 = vld [vmem:[%s141 + $0x8] sm:$0xff]
      %v157 = vsub.f32 0.0, %v155
      %v158 = vsub.f32 0.0, %v156
      %v159 = vmax.f32 %v157, 0.0
      %v160 = vmax.f32 %v158, 0.0
      %s161 = sadd.s32 %s16, %s17
      %s162 = smul.u32 %s161, 16
      %v163 = vlaneseq
      %v164 = vshrl.u32 %v163, 7
      %v165 = vadd.s32 %v164, 8
      %v166 = vstv %s162
      %v167 = vadd.s32 %v166, %v164
      %v168 = vadd.s32 %v166, %v165
      %vm169 = vcmp.lt.s32.totalorder %v167, 16
      %vm170 = vcmp.lt.s32.totalorder %v168, 16
      %v171 = vsel %vm169, %v159, 0.0
      %v172 = vsel %vm170, %v160, 0.0
      %v173 = vld [vmem:[%s149] sm:$0xff]
      %v174 = vadd.f32 %v171, %v172
      %v175 = vadd.f32 %v173, %v174
      %176 = vst [vmem:[%s149] sm:$0xff] %v175
      %p177 = scmp.lt.s32.totalorder %s16, 1
      %s178 = scalar_select %p177, %s16, 1
      %s179 = smul.addr %s178, 8
      %s180 = scalar_lea.vmem %s1, %s179
      // Predicated region
      $region29: #{one_sided.1} parent=23 // pred_check
        %p181 = pneg %p74
      $region30: #{one_sided.1} parent=23 // pred_check_branch
        %183 = sbr.rel (%p181) target = $region32
      $region31: #{one_sided.1} parent=23 // pred_region
        _
      $region32: #{one_sided.1} parent=23 // pred_fallthru
        _
    $region24: #{one_sided.1} parent=5 // pred_fallthru
      _
    %p184 = scmp.le.s32.totalorder 2, %s7
    // Predicated region
    $region33: #{one_sided.1} parent=5 // pred_check
      %p185 = pneg %p184
    $region34: #{one_sided.1} parent=5 // pred_check_branch
      %187 = sbr.rel (%p185) target = $region36
    $region35: #{one_sided.1} parent=5 // pred_region
      %s188 = ssub.s32 %s7, 2
      // Predicated region
      $region37: #{one_sided.1} parent=35 // pred_check
        %p189 = pneg %p80
      $region38: #{one_sided.1} parent=35 // pred_check_branch
        %191 = sbr.rel (%p189) target = $region40
      $region39: #{one_sided.1} parent=35 // pred_region
        %p192 = scmp.lt.s32.totalorder %s18, 1
        %s193 = scalar_select %p192, %s18, 1
        %s194 = smul.addr %s193, 8
        %s195 = scalar_lea.vmem %s1, %s194
      $region40: #{one_sided.1} parent=35 // pred_fallthru
        _
    $region36: #{one_sided.1} parent=5 // pred_fallthru
      _
  $region6: #{one_sided.1} parent=0 // loop_footer
    %s11 = sadd.s32 1, %s7
  $region7: #{one_sided.1} parent=0 // loop_footer_branch
    %6 = sbr.rel target = $region3
  $region8: #{one_sided.1} parent=0 // loop_exit
    _

</llo_original>
